<compile_context>
chip_gen: v6e
topology: v6e:2x2x1
jax: 0.10.0
libtpu: 0.0.40
codegen_flags: <defaults>
</compile_context>

<pallas_src>
import functools

import jax
import jax.numpy as jnp
from jax.experimental import pallas as pl
from jax.experimental.pallas import tpu as pltpu


# ------------------------- kernel (1): fused 1x1 conv -------------------------

def _matmul_bias_kernel(x_ref, w_ref, b_ref, o_ref):
    o_ref[...] = (
        jnp.dot(x_ref[...], w_ref[...], preferred_element_type=jnp.float32)
        + b_ref[...]
    ).astype(o_ref.dtype)


def _pick_tile_rows(n_rows, cin, cout, vmem_budget_bytes=8 * 1024 * 1024):
    """Largest row tile (multiple of 8) whose double-buffered in+out tiles fit the budget."""
    bytes_per_row = 4 * (cin + cout)
    t = vmem_budget_bytes // (2 * bytes_per_row)
    t = min(t, 4096)
    t = min(t, ((n_rows + 7) // 8) * 8)
    t = max((t // 8) * 8, 8)
    return int(t)


def matmul_bias(x2d, w, b):
    """1x1 conv (+folded BN) as a row-tiled matmul: [N, Cin] @ [Cin, Cout] + b."""
    N, Cin = x2d.shape
    Cout = w.shape[1]
    tile_n = _pick_tile_rows(N, Cin, Cout)
    n_pad = (-N) % tile_n
    xp = jnp.pad(x2d, ((0, n_pad), (0, 0))) if n_pad else x2d
    Np = N + n_pad
    out = pl.pallas_call(
        _matmul_bias_kernel,
        out_shape=jax.ShapeDtypeStruct((Np, Cout), x2d.dtype),
        grid=(Np // tile_n,),
        in_specs=[
            pl.BlockSpec((tile_n, Cin), lambda i: (i, 0)),
            pl.BlockSpec((Cin, Cout), lambda i: (0, 0)),
            pl.BlockSpec((1, Cout), lambda i: (0, 0)),
        ],
        out_specs=pl.BlockSpec((tile_n, Cout), lambda i: (i, 0)),
        compiler_params=pltpu.CompilerParams(dimension_semantics=("parallel",)),
    )(xp, w, b.reshape(1, Cout))
    return out[:N] if n_pad else out


# ---------------- kernel (2): depthwise 3x3 + BN + ReLU fused with pwconv ----------------

def _dw_pw_kernel(xp_ref, wdw_ref, bdw_ref, wpw_ref, bpw_ref, o_ref, flat_ref, *, H, W):
    xp = xp_ref[0]                     # (H+2, W+2, C) padded image
    wdw = wdw_ref[...]                 # (3, 3, C)
    C = xp.shape[-1]
    acc = jnp.zeros((H, W, C), jnp.float32)
    for ki in range(3):
        for kj in range(3):
            acc = acc + xp[ki:ki + H, kj:kj + W, :] * wdw[ki, kj, :]
    acc = jnp.maximum(acc + bdw_ref[...], 0.0)          # depthwise + BN + ReLU
    # flatten (H, W, C) -> (H*W, C) through VMEM scratch (sublane-aligned row stores)
    for i in range(H):
        flat_ref[i * W:(i + 1) * W, :] = acc[i]
    out = jnp.dot(flat_ref[...], wpw_ref[...],
                  preferred_element_type=jnp.float32) + bpw_ref[...]
    o_ref[0] = out.astype(o_ref.dtype)


def dwconv_pwconv(x_nhwc, wdw, bdw, wpw, bpw):
    """act(dwconv3x3+BN(x)) followed by pwconv 1x1+BN, fused.  Returns [B, H*W, Cout]."""
    B, H, W, C = x_nhwc.shape
    Cout = wpw.shape[1]
    # TODO(synk): at production spatial sizes move the halo in-kernel / strip-tile over H
    # so the padded copy never round-trips HBM and the block fits v7x's smaller VMEM.
    xp = jnp.pad(x_nhwc, ((0, 0), (1, 1), (1, 1), (0, 0)))
    return pl.pallas_call(
        functools.partial(_dw_pw_kernel, H=H, W=W),
        out_shape=jax.ShapeDtypeStruct((B, H * W, Cout), x_nhwc.dtype),
        grid=(B,),
        in_specs=[
            pl.BlockSpec((1, H + 2, W + 2, C), lambda b: (b, 0, 0, 0)),
            pl.BlockSpec((3, 3, C), lambda b: (0, 0, 0)),
            pl.BlockSpec((1, 1, C), lambda b: (0, 0, 0)),
            pl.BlockSpec((C, Cout), lambda b: (0, 0)),
            pl.BlockSpec((1, Cout), lambda b: (0, 0)),
        ],
        out_specs=pl.BlockSpec((1, H * W, Cout), lambda b: (b, 0, 0)),
        scratch_shapes=[pltpu.VMEM((H * W, C), jnp.float32)],
        compiler_params=pltpu.CompilerParams(dimension_semantics=("parallel",)),
    )(xp, wdw, bdw.reshape(1, 1, C), wpw, bpw.reshape(1, Cout))


# ------ kernel (3): fused axial attention + proj_encode + broadcast add + proj + gate ------

def _axial_fused_kernel(qkv4_ref, qkvf_ref, gate_ref, er_ref, ec_ref,
                        pos_row_ref, pos_col_ref,
                        wr_ref, br_ref, wc_ref, bc_ref, wp_ref, bp_ref,
                        o_ref, *, num_heads, key_dim, d, scale):
    x4 = qkv4_ref[0]                   # (H, W, 2*nh_kd + dh)   [q | k | v] channels
    xf = qkvf_ref[0]                   # (H*W, 2*nh_kd + dh)    same data, flat view
    nh_kd = num_heads * key_dim
    dh = num_heads * d

    # squeeze-axial means: row branch averages over W, column branch over H
    row_mean = jnp.mean(x4, axis=1)    # (H, C)
    col_mean = jnp.mean(x4, axis=0)    # (W, C)

    def axial(mean_lc, pos_ref, w_ref, b_ref, L):
        qk = mean_lc[:, :2 * nh_kd] + pos_ref[...]        # (L, 2*nh_kd) q|k means + pos
        vm = mean_lc[:, 2 * nh_kd:]                       # (L, dh)      v means
        acc = jnp.zeros((L, dh), jnp.float32)
        for h in range(num_heads):                        # all heads in one block
            qh = qk[:, h * key_dim:(h + 1) * key_dim]
            kh = qk[:, nh_kd + h * key_dim:nh_kd + (h + 1) * key_dim]
            vh = vm[:, h * d:(h + 1) * d]
            s = jax.lax.dot_general(qh, kh, (((1,), (1,)), ((), ())),
                                    preferred_element_type=jnp.float32) * scale
            s = s - jnp.max(s, axis=-1, keepdims=True)
            p = jnp.exp(s)
            p = p * pl.reciprocal(jnp.sum(p, axis=-1, keepdims=True), approx=True)
            oh = jnp.maximum(jnp.dot(p, vh, preferred_element_type=jnp.float32), 0.0)
            # relu(attn_out) @ proj_encode weight, applied per head block
            # (== relu(concat over heads) @ W, since the weight rows are sliced per head)
            acc = acc + jnp.dot(oh, w_ref[h * d:(h + 1) * d, :],
                                preferred_element_type=jnp.float32)
        return acc + b_ref[...]

    xx_row = axial(row_mean, pos_row_ref, wr_ref, br_ref, x4.shape[0])   # (H, dh)
    xx_col = axial(col_mean, pos_col_ref, wc_ref, bc_ref, x4.shape[1])   # (W, dh)

    # broadcast row over W and column over H via one-hot matmuls (keeps everything 2-D)
    row_b = jnp.dot(er_ref[...], xx_row, preferred_element_type=jnp.float32)  # (H*W, dh)
    col_b = jnp.dot(ec_ref[...], xx_col, preferred_element_type=jnp.float32)  # (H*W, dh)

    v_flat = xf[:, 2 * nh_kd:]                                                 # (H*W, dh)
    xx = jnp.maximum(v_flat + row_b + col_b, 0.0)
    proj = jnp.dot(xx, wp_ref[...], preferred_element_type=jnp.float32) + bp_ref[...]
    o_ref[0] = (jax.nn.sigmoid(proj) * gate_ref[0]).astype(o_ref.dtype)


def sea_attention_axial_gate(qkv_bhwc, gate_flat, pos_row, pos_col,
                             wr, br, wc, bc, wp, bp,
                             *, num_heads, key_dim, d, scale):
    B, H, W, Cqkv = qkv_bhwc.shape
    nh_kd = num_heads * key_dim
    dh = num_heads * d
    dim = wp.shape[1]
    qkv_flat = qkv_bhwc.reshape(B, H * W, Cqkv)
    # one-hot "broadcast" matrices: er[n, i] = 1 iff n // W == i ; ec[n, j] = 1 iff n % W == j
    er = (jnp.arange(H * W, dtype=jnp.int32)[:, None] // W
          == jnp.arange(H, dtype=jnp.int32)[None, :]).astype(qkv_bhwc.dtype)
    ec = (jnp.arange(H * W, dtype=jnp.int32)[:, None] % W
          == jnp.arange(W, dtype=jnp.int32)[None, :]).astype(qkv_bhwc.dtype)
    return pl.pallas_call(
        functools.partial(_axial_fused_kernel, num_heads=num_heads,
                          key_dim=key_dim, d=d, scale=scale),
        out_shape=jax.ShapeDtypeStruct((B, H * W, dim), qkv_bhwc.dtype),
        grid=(B,),
        in_specs=[
            pl.BlockSpec((1, H, W, Cqkv), lambda b: (b, 0, 0, 0)),
            pl.BlockSpec((1, H * W, Cqkv), lambda b: (b, 0, 0)),
            pl.BlockSpec((1, H * W, dim), lambda b: (b, 0, 0)),
            pl.BlockSpec((H * W, H), lambda b: (0, 0)),
            pl.BlockSpec((H * W, W), lambda b: (0, 0)),
            pl.BlockSpec((H, 2 * nh_kd), lambda b: (0, 0)),
            pl.BlockSpec((W, 2 * nh_kd), lambda b: (0, 0)),
            pl.BlockSpec((dh, dh), lambda b: (0, 0)),
            pl.BlockSpec((1, dh), lambda b: (0, 0)),
            pl.BlockSpec((dh, dh), lambda b: (0, 0)),
            pl.BlockSpec((1, dh), lambda b: (0, 0)),
            pl.BlockSpec((dh, dim), lambda b: (0, 0)),
            pl.BlockSpec((1, dim), lambda b: (0, 0)),
        ],
        out_specs=pl.BlockSpec((1, H * W, dim), lambda b: (b, 0, 0)),
        compiler_params=pltpu.CompilerParams(dimension_semantics=("parallel",)),
    )(qkv_bhwc, qkv_flat, gate_flat, er, ec, pos_row, pos_col,
      wr, br.reshape(1, dh), wc, bc.reshape(1, dh), wp, bp.reshape(1, dim))


# ------------------------- glue (plain JAX) -------------------------

def interp_linear(pos, out_size):
    """F.interpolate(pos[None], size=out_size, mode='linear', align_corners=False).
    pos: [C, in_size] -> [C, out_size]."""
    in_size = pos.shape[-1]
    if in_size == out_size:
        return pos
    idx = jnp.arange(out_size, dtype=jnp.float32)
    src = jnp.clip((idx + 0.5) * (in_size / out_size) - 0.5, 0.0, in_size - 1.0)
    i0 = jnp.floor(src).astype(jnp.int32)
    i1 = jnp.minimum(i0 + 1, in_size - 1)
    w = (src - i0.astype(jnp.float32))[None, :]
    return pos[:, i0] * (1.0 - w) + pos[:, i1] * w


def make_params(key, dim, key_dim, num_heads, attn_ratio=2):
    nh_kd = key_dim * num_heads
    d = int(attn_ratio * key_dim)
    dh = d * num_heads
    eps = 1e-5

    keys = iter(jax.random.split(key, 32))

    def conv_bn(cin, cout):
        w = jax.random.normal(next(keys), (cin, cout), jnp.float32) * (2.0 / cout) ** 0.5
        gamma = 1.0 + 0.1 * jax.random.normal(next(keys), (cout,), jnp.float32)
        beta = 0.1 * jax.random.normal(next(keys), (cout,), jnp.float32)
        scale = gamma / jnp.sqrt(1.0 + eps)
        return w * scale[None, :], beta

    p = {}
    p['wq'], p['bq'] = conv_bn(dim, nh_kd)
    p['wk'], p['bk'] = conv_bn(dim, nh_kd)
    p['wv'], p['bv'] = conv_bn(dim, dh)
    p['wr'], p['br'] = conv_bn(dh, dh)         # proj_encode_row
    p['wc'], p['bc'] = conv_bn(dh, dh)         # proj_encode_column
    p['wp'], p['bp'] = conv_bn(dh, dim)        # proj
    p['wpw'], p['bpw'] = conv_bn(2 * dh, dim)  # pwconv

    wdw = jax.random.normal(next(keys), (3, 3, 2 * dh), jnp.float32) * (2.0 / 9.0) ** 0.5
    gdw = 1.0 + 0.1 * jax.random.normal(next(keys), (2 * dh,), jnp.float32)
    bdw = 0.1 * jax.random.normal(next(keys), (2 * dh,), jnp.float32)
    p['wdw'] = wdw * (gdw / jnp.sqrt(1.0 + eps))[None, None, :]
    p['bdw'] = bdw

    for name in ('pos_rowq', 'pos_rowk', 'pos_colq', 'pos_colk'):
        p[name] = jax.random.normal(next(keys), (nh_kd, 16), jnp.float32)
    return p


def sea_attention_forward(x_nchw, params, *, key_dim, num_heads, attn_ratio=2):
    B, C, H, W = x_nchw.shape
    nh_kd = key_dim * num_heads
    d = int(attn_ratio * key_dim)
    dh = d * num_heads
    qkv_ch = 2 * nh_kd + dh
    scale = key_dim ** -0.5

    x = jnp.transpose(x_nchw, (0, 2, 3, 1))                  # NHWC
    xf = x.reshape(B * H * W, C)

    # (1) q|k|v 1x1 convs (+folded BN) fused into one matmul (no concat, one HBM write)
    w_qkv = jnp.concatenate([params['wq'], params['wk'], params['wv']], axis=1)
    b_qkv = jnp.concatenate([params['bq'], params['bk'], params['bv']], axis=0)
    qkv = matmul_bias(xf, w_qkv, b_qkv).reshape(B, H, W, qkv_ch)

    # (2) detail branch: act(dwconv3x3+BN(qkv)) -> pwconv 1x1+BN, fused
    gate = dwconv_pwconv(qkv, params['wdw'], params['bdw'],
                         params['wpw'], params['bpw'])       # (B, H*W, dim)

    # (3) row+column squeeze-axial attention + proj_encode_{row,col} + broadcast add
    #     + proj + sigmoid gate, all fused per batch element
    pos_row = jnp.concatenate([interp_linear(params['pos_rowq'], H).T,
                               interp_linear(params['pos_rowk'], H).T], axis=1)
    pos_col = jnp.concatenate([interp_linear(params['pos_colq'], W).T,
                               interp_linear(params['pos_colk'], W).T], axis=1)
    out = sea_attention_axial_gate(
        qkv, gate, pos_row, pos_col,
        params['wr'], params['br'], params['wc'], params['bc'],
        params['wp'], params['bp'],
        num_heads=num_heads, key_dim=key_dim, d=d, scale=scale)   # (B, H*W, dim)
    return jnp.transpose(out.reshape(B, H, W, C), (0, 3, 1, 2))   # back to NCHW


# ------------------------- pure-JAX reference (NCHW, mirrors torch) -------------------------

def reference_forward(x, params, *, key_dim, num_heads, attn_ratio=2):
    B, C, H, W = x.shape
    d = int(attn_ratio * key_dim)
    dh = d * num_heads
    scale = key_dim ** -0.5

    def conv1x1(t, w, b):
        return jnp.einsum('bihw,io->bohw', t, w) + b[None, :, None, None]

    q = conv1x1(x, params['wq'], params['bq'])
    k = conv1x1(x, params['wk'], params['bk'])
    v = conv1x1(x, params['wv'], params['bv'])
    qkv = jnp.concatenate([q, k, v], axis=1)
    xp = jnp.pad(qkv, ((0, 0), (0, 0), (1, 1), (1, 1)))
    dw = jnp.zeros_like(qkv)
    for ki in range(3):
        for kj in range(3):
            dw = dw + xp[:, :, ki:ki + H, kj:kj + W] * params['wdw'][ki, kj, :][None, :, None, None]
    dw = jnp.maximum(dw + params['bdw'][None, :, None, None], 0.0)
    qkv = conv1x1(dw, params['wpw'], params['bpw'])

    def axial(qm, km, vm, pos_q, pos_k, L):
        qm = qm + interp_linear(pos_q, L)[None]
        km = km + interp_linear(pos_k, L)[None]
        qh = jnp.transpose(qm.reshape(B, num_heads, key_dim, L), (0, 1, 3, 2))
        kh = km.reshape(B, num_heads, key_dim, L)
        vh = jnp.transpose(vm.reshape(B, num_heads, d, L), (0, 1, 3, 2))
        att = jax.nn.softmax(jnp.einsum('bnlk,bnkm->bnlm', qh, kh) * scale, axis=-1)
        o = jnp.einsum('bnlm,bnmd->bnld', att, vh)
        return jnp.transpose(o, (0, 1, 3, 2)).reshape(B, dh, L)

    xr = axial(q.mean(-1), k.mean(-1), v.mean(-1), params['pos_rowq'], params['pos_rowk'], H)
    xr = conv1x1(jnp.maximum(xr, 0.0)[..., None], params['wr'], params['br'])       # [B,dh,H,1]
    xc = axial(q.mean(-2), k.mean(-2), v.mean(-2), params['pos_colq'], params['pos_colk'], W)
    xc = conv1x1(jnp.maximum(xc, 0.0)[:, :, None, :], params['wc'], params['bc'])   # [B,dh,1,W]
    xx = v + xr + xc
    xx = conv1x1(jnp.maximum(xx, 0.0), params['wp'], params['bp'])
    return jax.nn.sigmoid(xx) * qkv


if __name__ == "__main__":
    B, dim, H, W = 2, 16, 16, 16
    key_dim, num_heads = 8, 2

    key = jax.random.PRNGKey(0)
    kx, kp = jax.random.split(key)
    x = jax.random.normal(kx, (B, dim, H, W), jnp.float32)
    params = make_params(kp, dim, key_dim, num_heads)

    out = sea_attention_forward(x, params, key_dim=key_dim, num_heads=num_heads)
    out = jax.block_until_ready(out)
    assert out.shape == (B, dim, H, W)

    ref = reference_forward(x, params, key_dim=key_dim, num_heads=num_heads)
    err = float(jnp.max(jnp.abs(out - ref)))
    # tolerance widened vs exact-f32: the softmax denominator uses the EUP approximate
    # reciprocal (pl.reciprocal(..., approx=True)); structural bugs give errors >> 1e-1.
    assert err < 2e-2, f"mismatch vs reference: {err}"
    print("KERNEL_OK")
</pallas_src>

<mosaic_0001>
module attributes {stable_mosaic.version = 11 : i64} {
  func.func @_matmul_bias_kernel(%arg0: i32, %arg1: memref<512x16xf32, #tpu.memory_space<vmem>>, %arg2: memref<16x64xf32, #tpu.memory_space<vmem>>, %arg3: memref<1x64xf32, #tpu.memory_space<vmem>>, %arg4: memref<512x64xf32, #tpu.memory_space<vmem>>) attributes {dimension_semantics = [#tpu.dimension_semantics<parallel>], iteration_bounds = array<i64: 1>, scalar_prefetch = 0 : i64, scratch_operands = 0 : i64, tpu.core_type = #tpu.core_type<tc>, window_params = [{transform_indices = @transform_0, window_bounds = array<i64: 512, 16>}, {pipeline_mode = #tpu.pipeline_mode<synchronous>, transform_indices = @transform_1, window_bounds = array<i64: 16, 64>}, {pipeline_mode = #tpu.pipeline_mode<synchronous>, transform_indices = @transform_2, window_bounds = array<i64: 1, 64>}, {transform_indices = @transform_3, window_bounds = array<i64: 512, 64>}]} {
    %c0 = arith.constant 0 : index
    %c0_0 = arith.constant 0 : index
    %0 = vector.load %arg1[%c0, %c0_0] : memref<512x16xf32, #tpu.memory_space<vmem>>, vector<512x16xf32>
    %c0_1 = arith.constant 0 : index
    %c0_2 = arith.constant 0 : index
    %1 = vector.load %arg2[%c0_1, %c0_2] : memref<16x64xf32, #tpu.memory_space<vmem>>, vector<16x64xf32>
    %cst = arith.constant dense<0.000000e+00> : vector<512x64xf32>
    %2 = tpu.matmul %0, %1, %cst {dimension_numbers = #tpu.dot_dimension_numbers<[1], [0], [0], [1], [0, 0, 1, 1], [], []>} : vector<512x16xf32>, vector<16x64xf32>, vector<512x64xf32> -> vector<512x64xf32>
    %c0_3 = arith.constant 0 : index
    %c0_4 = arith.constant 0 : index
    %3 = vector.load %arg3[%c0_3, %c0_4] : memref<1x64xf32, #tpu.memory_space<vmem>>, vector<1x64xf32>
    %4 = vector.broadcast %3 : vector<1x64xf32> to vector<512x64xf32>
    %5 = arith.addf %2, %4 : vector<512x64xf32>
    %c0_5 = arith.constant 0 : index
    %c0_6 = arith.constant 0 : index
    %6 = vector.load %arg4[%c0_5, %c0_6] : memref<512x64xf32, #tpu.memory_space<vmem>>, vector<512x64xf32>
    tpu.vector_store %arg4[%c0_5, %c0_6], %5 {strides = array<i32>} : memref<512x64xf32, #tpu.memory_space<vmem>>, vector<512x64xf32>,
    return
  }
  func.func @transform_0(%arg0: i32) -> (i32, i32) {
    %c0_i32 = arith.constant 0 : i32
    %c0_i32_0 = arith.constant 0 : i32
    return %arg0, %c0_i32 : i32, i32
  }
  func.func @transform_1(%arg0: i32) -> (i32, i32) {
    %c0_i32 = arith.constant 0 : i32
    %c0_i32_0 = arith.constant 0 : i32
    %c0_i32_1 = arith.constant 0 : i32
    return %c0_i32, %c0_i32_0 : i32, i32
  }
  func.func @transform_2(%arg0: i32) -> (i32, i32) {
    %c0_i32 = arith.constant 0 : i32
    %c0_i32_0 = arith.constant 0 : i32
    %c0_i32_1 = arith.constant 0 : i32
    return %c0_i32, %c0_i32_0 : i32, i32
  }
  func.func @transform_3(%arg0: i32) -> (i32, i32) {
    %c0_i32 = arith.constant 0 : i32
    %c0_i32_0 = arith.constant 0 : i32
    return %arg0, %c0_i32 : i32, i32
  }
}

</mosaic_0001>

<llo_original>
// kernel: tpu_custom_call.1
$region0: #{tpu_custom_call.1}
  #allocation0 [shape = 'u32[]', space=smem, size = 0x4, offset = 0x4, fixed_abs, tag = 'smem constant byte address 0x4 - core index']
  #allocation1 [shape = 'u32[144,128]{1,0:T(1,128)}', space=vmem, size = 0x12000, scoped, tag = 'internal scratch']
  %s0 = inlined_call_operand.vmem [shape: f32[512,16], index: 0, kind: input, shape index: {}]
  %s1 = inlined_call_operand.vmem [shape: f32[16,64], index: 1, kind: input, shape index: {}]
  %s2 = inlined_call_operand.vmem [shape: f32[1,64], index: 2, kind: input, shape index: {}]
  %s3 = inlined_call_operand.vmem [shape: f32[512,64], index: 3, kind: output, shape index: {}]
  %s4 = sld [smem:[#allocation0]]
  $region22: #{tpu_custom_call.1} parent=0
    _
  %s6 = ssub.s32 1, %s4
  %s7 = scalar_select 0, %s6, %s4
  // Predicated region
  $region2: #{tpu_custom_call.1} parent=0 // pred_check
    _
  $region3: #{tpu_custom_call.1} parent=0 // pred_check_branch
    %9 = sbr.rel (0) target = $region5
  $region4: #{tpu_custom_call.1} parent=0 // pred_region
    _
  $region5: #{tpu_custom_call.1} parent=0 // pred_fallthru
    _
  // Predicated region
  $region6: #{tpu_custom_call.1} parent=0 // pred_check
    _
  $region7: #{tpu_custom_call.1} parent=0 // pred_check_branch
    %11 = sbr.rel (0) target = $region9
  $region8: #{tpu_custom_call.1} parent=0 // pred_region
    _
  $region9: #{tpu_custom_call.1} parent=0 // pred_fallthru
    _
  // Predicated region
  $region10: #{tpu_custom_call.1} parent=0 // pred_check
    _
  $region11: #{tpu_custom_call.1} parent=0 // pred_check_branch
    %13 = sbr.rel (0) target = $region13
  $region12: #{tpu_custom_call.1} parent=0 // pred_region
    _
  $region13: #{tpu_custom_call.1} parent=0 // pred_fallthru
    _
  %v14 = vld [vmem:[%s0] sm:$0xff]
  %v15 = vld [vmem:[%s0 + $0x8] sm:$0xff]
  %v16 = vld [vmem:[%s0 + $0x10] sm:$0xff]
  %v17 = vld [vmem:[%s0 + $0x18] sm:$0xff]
  %v18 = vld [vmem:[%s0 + $0x20] sm:$0xff]
  %v19 = vld [vmem:[%s0 + $0x28] sm:$0xff]
  %v20 = vld [vmem:[%s0 + $0x30] sm:$0xff]
  %v21 = vld [vmem:[%s0 + $0x38] sm:$0xff]
  %v22 = vld [vmem:[%s0 + $0x40] sm:$0xff]
  %v23 = vld [vmem:[%s0 + $0x48] sm:$0xff]
  %v24 = vld [vmem:[%s0 + $0x50] sm:$0xff]
  %v25 = vld [vmem:[%s0 + $0x58] sm:$0xff]
  %v26 = vld [vmem:[%s0 + $0x60] sm:$0xff]
  %v27 = vld [vmem:[%s0 + $0x68] sm:$0xff]
  %v28 = vld [vmem:[%s0 + $0x70] sm:$0xff]
  %v29 = vld [vmem:[%s0 + $0x78] sm:$0xff]
  %v30 = vld [vmem:[%s0 + $0x80] sm:$0xff]
  %v31 = vld [vmem:[%s0 + $0x88] sm:$0xff]
  %v32 = vld [vmem:[%s0 + $0x90] sm:$0xff]
  %v33 = vld [vmem:[%s0 + $0x98] sm:$0xff]
  %v34 = vld [vmem:[%s0 + $0xa0] sm:$0xff]
  %v35 = vld [vmem:[%s0 + $0xa8] sm:$0xff]
  %v36 = vld [vmem:[%s0 + $0xb0] sm:$0xff]
  %v37 = vld [vmem:[%s0 + $0xb8] sm:$0xff]
  %v38 = vld [vmem:[%s0 + $0xc0] sm:$0xff]
  %v39 = vld [vmem:[%s0 + $0xc8] sm:$0xff]
  %v40 = vld [vmem:[%s0 + $0xd0] sm:$0xff]
  %v41 = vld [vmem:[%s0 + $0xd8] sm:$0xff]
  %v42 = vld [vmem:[%s0 + $0xe0] sm:$0xff]
  %v43 = vld [vmem:[%s0 + $0xe8] sm:$0xff]
  %v44 = vld [vmem:[%s0 + $0xf0] sm:$0xff]
  %v45 = vld [vmem:[%s0 + $0xf8] sm:$0xff]
  %v46 = vld [vmem:[%s0 + $0x100] sm:$0xff]
  %v47 = vld [vmem:[%s0 + $0x108] sm:$0xff]
  %v48 = vld [vmem:[%s0 + $0x110] sm:$0xff]
  %v49 = vld [vmem:[%s0 + $0x118] sm:$0xff]
  %v50 = vld [vmem:[%s0 + $0x120] sm:$0xff]
  %v51 = vld [vmem:[%s0 + $0x128] sm:$0xff]
  %v52 = vld [vmem:[%s0 + $0x130] sm:$0xff]
  %v53 = vld [vmem:[%s0 + $0x138] sm:$0xff]
  %v54 = vld [vmem:[%s0 + $0x140] sm:$0xff]
  %v55 = vld [vmem:[%s0 + $0x148] sm:$0xff]
  %v56 = vld [vmem:[%s0 + $0x150] sm:$0xff]
  %v57 = vld [vmem:[%s0 + $0x158] sm:$0xff]
  %v58 = vld [vmem:[%s0 + $0x160] sm:$0xff]
  %v59 = vld [vmem:[%s0 + $0x168] sm:$0xff]
  %v60 = vld [vmem:[%s0 + $0x170] sm:$0xff]
  %v61 = vld [vmem:[%s0 + $0x178] sm:$0xff]
  %v62 = vld [vmem:[%s0 + $0x180] sm:$0xff]
  %v63 = vld [vmem:[%s0 + $0x188] sm:$0xff]
  %v64 = vld [vmem:[%s0 + $0x190] sm:$0xff]
  %v65 = vld [vmem:[%s0 + $0x198] sm:$0xff]
  %v66 = vld [vmem:[%s0 + $0x1a0] sm:$0xff]
  %v67 = vld [vmem:[%s0 + $0x1a8] sm:$0xff]
  %v68 = vld [vmem:[%s0 + $0x1b0] sm:$0xff]
  %v69 = vld [vmem:[%s0 + $0x1b8] sm:$0xff]
  %v70 = vld [vmem:[%s0 + $0x1c0] sm:$0xff]
  %v71 = vld [vmem:[%s0 + $0x1c8] sm:$0xff]
  %v72 = vld [vmem:[%s0 + $0x1d0] sm:$0xff]
  %v73 = vld [vmem:[%s0 + $0x1d8] sm:$0xff]
  %v74 = vld [vmem:[%s0 + $0x1e0] sm:$0xff]
  %v75 = vld [vmem:[%s0 + $0x1e8] sm:$0xff]
  %v76 = vld [vmem:[%s0 + $0x1f0] sm:$0xff]
  %v77 = vld [vmem:[%s0 + $0x1f8] sm:$0xff]
  %v78 = vld [vmem:[%s1] sm:$0xff]
  %v79 = vld [vmem:[%s1 + $0x8] sm:$0xff]
  %v80 = vld [vmem:[%s2] sm:$0x1]
  %v82 = vlaneseq
  %v83 = vshrl.u32 %v82, 7
  %v84 = vsub.s32 0, %v83
  %v85 = vrot.slane %v80, %v84
  %vm87 = vcmask 130048
  %v89 = vsel %vm87, %v14, 0
  %v92 = vsel %vm87, %v15, 0
  %v95 = vsel %vm87, %v16, 0
  %v98 = vsel %vm87, %v17, 0
  %v101 = vsel %vm87, %v18, 0
  %v104 = vsel %vm87, %v19, 0
  %v107 = vsel %vm87, %v20, 0
  %v110 = vsel %vm87, %v21, 0
  %v113 = vsel %vm87, %v22, 0
  %v116 = vsel %vm87, %v23, 0
  %v119 = vsel %vm87, %v24, 0
  %v122 = vsel %vm87, %v25, 0
  %v125 = vsel %vm87, %v26, 0
  %v128 = vsel %vm87, %v27, 0
  %v131 = vsel %vm87, %v28, 0
  %v134 = vsel %vm87, %v29, 0
  %v137 = vsel %vm87, %v30, 0
  %v140 = vsel %vm87, %v31, 0
  %v143 = vsel %vm87, %v32, 0
  %v146 = vsel %vm87, %v33, 0
  %v149 = vsel %vm87, %v34, 0
  %v152 = vsel %vm87, %v35, 0
  %v155 = vsel %vm87, %v36, 0
  %v158 = vsel %vm87, %v37, 0
  %v161 = vsel %vm87, %v38, 0
  %v164 = vsel %vm87, %v39, 0
  %v167 = vsel %vm87, %v40, 0
  %v170 = vsel %vm87, %v41, 0
  %v173 = vsel %vm87, %v42, 0
  %v176 = vsel %vm87, %v43, 0
  %v179 = vsel %vm87, %v44, 0
  %v182 = vsel %vm87, %v45, 0
  %v185 = vsel %vm87, %v46, 0
  %v188 = vsel %vm87, %v47, 0
  %v191 = vsel %vm87, %v48, 0
  %v194 = vsel %vm87, %v49, 0
  %v197 = vsel %vm87, %v50, 0
  %v200 = vsel %vm87, %v51, 0
  %v203 = vsel %vm87, %v52, 0
  %v206 = vsel %vm87, %v53, 0
  %v209 = vsel %vm87, %v54, 0
  %v212 = vsel %vm87, %v55, 0
  %v215 = vsel %vm87, %v56, 0
  %v218 = vsel %vm87, %v57, 0
  %v221 = vsel %vm87, %v58, 0
  %v224 = vsel %vm87, %v59, 0
  %v227 = vsel %vm87, %v60, 0
  %v230 = vsel %vm87, %v61, 0
  %v233 = vsel %vm87, %v62, 0
  %v236 = vsel %vm87, %v63, 0
  %v239 = vsel %vm87, %v64, 0
  %v242 = vsel %vm87, %v65, 0
  %v245 = vsel %vm87, %v66, 0
  %v248 = vsel %vm87, %v67, 0
  %v251 = vsel %vm87, %v68, 0
  %v254 = vsel %vm87, %v69, 0
  %v257 = vsel %vm87, %v70, 0
  %v260 = vsel %vm87, %v71, 0
  %v263 = vsel %vm87, %v72, 0
  %v266 = vsel %vm87, %v73, 0
  %v269 = vsel %vm87, %v74, 0
  %v272 = vsel %vm87, %v75, 0
  %v275 = vsel %vm87, %v76, 0
  %v278 = vsel %vm87, %v77, 0
  %280 = vmatprep.subr.mxu0 0.0
  %281 = vmatpush1.msra.mxu0 0.0
  %282 = vmatprep.subr.mxu0 0.0
  %283 = vmatpush1.msra.mxu0 0.0
  %284 = vmatprep.subr.mxu0 0.0
  %285 = vmatpush1.msra.mxu0 0.0
  %286 = vmatprep.subr.mxu0 0.0
  %287 = vmatpush1.msra.mxu0 0.0
  %288 = vmatprep.subr.mxu0 0.0
  %289 = vmatpush1.msra.mxu0 0.0
  %290 = vmatprep.subr.mxu0 0.0
  %291 = vmatpush1.msra.mxu0 0.0
  %292 = vmatprep.subr.mxu0 0.0
  %293 = vmatpush1.msra.mxu0 0.0
  %294 = vmatprep.subr.mxu0 0.0
  %295 = vmatpush1.msra.mxu0 0.0
  %296 = vmatprep.subr.mxu0 0.0
  %297 = vmatpush1.msra.mxu0 0.0
  %298 = vmatprep.subr.mxu0 0.0
  %299 = vmatpush1.msra.mxu0 0.0
  %300 = vmatprep.subr.mxu0 0.0
  %301 = vmatpush1.msra.mxu0 0.0
  %302 = vmatprep.subr.mxu0 0.0
  %303 = vmatpush1.msra.mxu0 0.0
  %304 = vmatprep.subr.mxu0 0.0
  %305 = vmatpush1.msra.mxu0 0.0
  %306 = vmatprep.subr.mxu0 0.0
  %307 = vmatpush1.msra.mxu0 0.0
  %308 = vmatprep.subr.mxu0 0.0
  %309 = vmatpush1.msra.mxu0 %v79
  %310 = vmatprep.subr.mxu0 0.0
  %311 = vmatpush1.msra.mxu0 %v78
  %312 = vmatprep.subr.mxu0 0.0
  %313 = vmatpush2.msra.mxu0 0.0
  %314 = vmatprep.subr.mxu0 0.0
  %315 = vmatpush2.msra.mxu0 0.0
  %316 = vmatprep.subr.mxu0 0.0
  %317 = vmatpush2.msra.mxu0 0.0
  %318 = vmatprep.subr.mxu0 0.0
  %319 = vmatpush2.msra.mxu0 0.0
  %320 = vmatprep.subr.mxu0 0.0
  %321 = vmatpush2.msra.mxu0 0.0
  %322 = vmatprep.subr.mxu0 0.0
  %323 = vmatpush2.msra.mxu0 0.0
  %324 = vmatprep.subr.mxu0 0.0
  %325 = vmatpush2.msra.mxu0 0.0
  %326 = vmatprep.subr.mxu0 0.0
  %327 = vmatpush2.msra.mxu0 0.0
  %328 = vmatprep.subr.mxu0 0.0
  %329 = vmatpush2.msra.mxu0 0.0
  %330 = vmatprep.subr.mxu0 0.0
  %331 = vmatpush2.msra.mxu0 0.0
  %332 = vmatprep.subr.mxu0 0.0
  %333 = vmatpush2.msra.mxu0 0.0
  %334 = vmatprep.subr.mxu0 0.0
  %335 = vmatpush2.msra.mxu0 0.0
  %336 = vmatprep.subr.mxu0 0.0
  %337 = vmatpush2.msra.mxu0 0.0
  %338 = vmatprep.subr.mxu0 0.0
  %339 = vmatpush2.msra.mxu0 0.0
  %340 = vmatprep.subr.mxu0 0.0
  %341 = vmatpush2.msra.mxu0 0.0
  %342 = vmatprep.subr.mxu0 0.0
  %343 = vmatpush2.msra.mxu0 0.0
  %344 = vmatprep.mubr.f32.mxu0 0.0
  %345 = vmatmul.mubr.f32.gmra.mxu0 %v89
  %v346 = vpop.f32.mrf.mxu0
  %v347 = vadd.f32 %v85, %v346
  %v348 = vpop.f32.mrf.mxu0
  %349 = vmatprep.mubr.f32.mxu0 0.0
  %350 = vmatmul.mubr.f32.gmra.mxu0 %v92
  %v351 = vpop.f32.mrf.mxu0
  %v352 = vadd.f32 %v85, %v351
  %v353 = vpop.f32.mrf.mxu0
  %354 = vmatprep.mubr.f32.mxu0 0.0
  %355 = vmatmul.mubr.f32.gmra.mxu0 %v95
  %v356 = vpop.f32.mrf.mxu0
  %v357 = vadd.f32 %v85, %v356
  %v358 = vpop.f32.mrf.mxu0
  %359 = vmatprep.mubr.f32.mxu0 0.0
  %360 = vmatmul.mubr.f32.gmra.mxu0 %v98
  %v361 = vpop.f32.mrf.mxu0
  %v362 = vadd.f32 %v85, %v361
  %v363 = vpop.f32.mrf.mxu0
  %364 = vmatprep.mubr.f32.mxu0 0.0
  %365 = vmatmul.mubr.f32.gmra.mxu0 %v101
  %v366 = vpop.f32.mrf.mxu0
  %v367 = vadd.f32 %v85, %v366
  %v368 = vpop.f32.mrf.mxu0
  %369 = vmatprep.mubr.f32.mxu0 0.0
  %370 = vmatmul.mubr.f32.gmra.mxu0 %v104
  %v371 = vpop.f32.mrf.mxu0
  %v372 = vadd.f32 %v85, %v371
  %v373 = vpop.f32.mrf.mxu0
  %374 = vmatprep.mubr.f32.mxu0 0.0
  %375 = vmatmul.mubr.f32.gmra.mxu0 %v107
  %v376 = vpop.f32.mrf.mxu0
  %v377 = vadd.f32 %v85, %v376
  %v378 = vpop.f32.mrf.mxu0
  %379 = vmatprep.mubr.f32.mxu0 0.0
  %380 = vmatmul.mubr.f32.gmra.mxu0 %v110
  %v381 = vpop.f32.mrf.mxu0
  %v382 = vadd.f32 %v85, %v381
  %v383 = vpop.f32.mrf.mxu0
  %384 = vmatprep.mubr.f32.mxu0 0.0
  %385 = vmatmul.mubr.f32.gmra.mxu0 %v113
  %v386 = vpop.f32.mrf.mxu0
  %v387 = vadd.f32 %v85, %v386
  %v388 = vpop.f32.mrf.mxu0
  %389 = vmatprep.mubr.f32.mxu0 0.0
  %390 = vmatmul.mubr.f32.gmra.mxu0 %v116
  %v391 = vpop.f32.mrf.mxu0
  %v392 = vadd.f32 %v85, %v391
  %v393 = vpop.f32.mrf.mxu0
  %394 = vmatprep.mubr.f32.mxu0 0.0
  %395 = vmatmul.mubr.f32.gmra.mxu0 %v119
  %v396 = vpop.f32.mrf.mxu0
  %v397 = vadd.f32 %v85, %v396
  %v398 = vpop.f32.mrf.mxu0
  %399 = vmatprep.mubr.f32.mxu0 0.0
  %400 = vmatmul.mubr.f32.gmra.mxu0 %v122
  %v401 = vpop.f32.mrf.mxu0
  %v402 = vadd.f32 %v85, %v401
  %v403 = vpop.f32.mrf.mxu0
  %404 = vmatprep.mubr.f32.mxu0 0.0
  %405 = vmatmul.mubr.f32.gmra.mxu0 %v125
  %v406 = vpop.f32.mrf.mxu0
  %v407 = vadd.f32 %v85, %v406
  %v408 = vpop.f32.mrf.mxu0
  %409 = vmatprep.mubr.f32.mxu0 0.0
  %410 = vmatmul.mubr.f32.gmra.mxu0 %v128
  %v411 = vpop.f32.mrf.mxu0
  %v412 = vadd.f32 %v85, %v411
  %v413 = vpop.f32.mrf.mxu0
  %414 = vmatprep.mubr.f32.mxu0 0.0
  %415 = vmatmul.mubr.f32.gmra.mxu0 %v131
  %v416 = vpop.f32.mrf.mxu0
  %v417 = vadd.f32 %v85, %v416
  %v418 = vpop.f32.mrf.mxu0
  %419 = vmatprep.mubr.f32.mxu0 0.0
  %420 = vmatmul.mubr.f32.gmra.mxu0 %v134
  %v421 = vpop.f32.mrf.mxu0
  %v422 = vadd.f32 %v85, %v421
  %v423 = vpop.f32.mrf.mxu0
  %424 = vmatprep.mubr.f32.mxu0 0.0
  %425 = vmatmul.mubr.f32.gmra.mxu0 %v137
  %v426 = vpop.f32.mrf.mxu0
  %v427 = vadd.f32 %v85, %v426
  %v428 = vpop.f32.mrf.mxu0
  %429 = vmatprep.mubr.f32.mxu0 0.0
  %430 = vmatmul.mubr.f32.gmra.mxu0 %v140
  %v431 = vpop.f32.mrf.mxu0
  %v432 = vadd.f32 %v85, %v431
  %v433 = vpop.f32.mrf.mxu0
  %434 = vmatprep.mubr.f32.mxu0 0.0
  %435 = vmatmul.mubr.f32.gmra.mxu0 %v143
  %v436 = vpop.f32.mrf.mxu0
  %v437 = vadd.f32 %v85, %v436
  %v438 = vpop.f32.mrf.mxu0
  %439 = vmatprep.mubr.f32.mxu0 0.0
  %440 = vmatmul.mubr.f32.gmra.mxu0 %v146
  %v441 = vpop.f32.mrf.mxu0
  %v442 = vadd.f32 %v85, %v441
  %v443 = vpop.f32.mrf.mxu0
  %444 = vmatprep.mubr.f32.mxu0 0.0
  %445 = vmatmul.mubr.f32.gmra.mxu0 %v149
  %v446 = vpop.f32.mrf.mxu0
  %v447 = vadd.f32 %v85, %v446
  %v448 = vpop.f32.mrf.mxu0
  %449 = vmatprep.mubr.f32.mxu0 0.0
  %450 = vmatmul.mubr.f32.gmra.mxu0 %v152
  %v451 = vpop.f32.mrf.mxu0
  %v452 = vadd.f32 %v85, %v451
  %v453 = vpop.f32.mrf.mxu0
  %454 = vmatprep.mubr.f32.mxu0 0.0
  %455 = vmatmul.mubr.f32.gmra.mxu0 %v155
  %v456 = vpop.f32.mrf.mxu0
  %v457 = vadd.f32 %v85, %v456
  %v458 = vpop.f32.mrf.mxu0
  %459 = vmatprep.mubr.f32.mxu0 0.0
  %460 = vmatmul.mubr.f32.gmra.mxu0 %v158
  %v461 = vpop.f32.mrf.mxu0
  %v462 = vadd.f32 %v85, %v461
  %v463 = vpop.f32.mrf.mxu0
  %464 = vmatprep.mubr.f32.mxu0 0.0
  %465 = vmatmul.mubr.f32.gmra.mxu0 %v161
  %v466 = vpop.f32.mrf.mxu0
  %v467 = vadd.f32 %v85, %v466
  %v468 = vpop.f32.mrf.mxu0
  %469 = vmatprep.mubr.f32.mxu0 0.0
  %470 = vmatmul.mubr.f32.gmra.mxu0 %v164
  %v471 = vpop.f32.mrf.mxu0
  %v472 = vadd.f32 %v85, %v471
  %v473 = vpop.f32.mrf.mxu0
  %474 = vmatprep.mubr.f32.mxu0 0.0
  %475 = vmatmul.mubr.f32.gmra.mxu0 %v167
  %v476 = vpop.f32.mrf.mxu0
  %v477 = vadd.f32 %v85, %v476
  %v478 = vpop.f32.mrf.mxu0
  %479 = vmatprep.mubr.f32.mxu0 0.0
  %480 = vmatmul.mubr.f32.gmra.mxu0 %v170
  %v481 = vpop.f32.mrf.mxu0
  %v482 = vadd.f32 %v85, %v481
  %v483 = vpop.f32.mrf.mxu0
  %484 = vmatprep.mubr.f32.mxu0 0.0
  %485 = vmatmul.mubr.f32.gmra.mxu0 %v173
  %v486 = vpop.f32.mrf.mxu0
  %v487 = vadd.f32 %v85, %v486
  %v488 = vpop.f32.mrf.mxu0
  %489 = vmatprep.mubr.f32.mxu0 0.0
  %490 = vmatmul.mubr.f32.gmra.mxu0 %v176
  %v491 = vpop.f32.mrf.mxu0
  %v492 = vadd.f32 %v85, %v491
  %v493 = vpop.f32.mrf.mxu0
  %494 = vmatprep.mubr.f32.mxu0 0.0
  %495 = vmatmul.mubr.f32.gmra.mxu0 %v179
  %v496 = vpop.f32.mrf.mxu0
  %v497 = vadd.f32 %v85, %v496
  %v498 = vpop.f32.mrf.mxu0
  %499 = vmatprep.mubr.f32.mxu0 0.0
  %500 = vmatmul.mubr.f32.gmra.mxu0 %v182
  %v501 = vpop.f32.mrf.mxu0
  %v502 = vadd.f32 %v85, %v501
  %v503 = vpop.f32.mrf.mxu0
  %504 = vmatprep.mubr.f32.mxu0 0.0
  %505 = vmatmul.mubr.f32.gmra.mxu0 %v185
  %v506 = vpop.f32.mrf.mxu0
  %v507 = vadd.f32 %v85, %v506
  %v508 = vpop.f32.mrf.mxu0
  %509 = vmatprep.mubr.f32.mxu0 0.0
  %510 = vmatmul.mubr.f32.gmra.mxu0 %v188
  %v511 = vpop.f32.mrf.mxu0
  %v512 = vadd.f32 %v85, %v511
  %v513 = vpop.f32.mrf.mxu0
  %514 = vmatprep.mubr.f32.mxu0 0.0
  %515 = vmatmul.mubr.f32.gmra.mxu0 %v191
  %v516 = vpop.f32.mrf.mxu0
  %v517 = vadd.f32 %v85, %v516
  %v518 = vpop.f32.mrf.mxu0
  %519 = vmatprep.mubr.f32.mxu0 0.0
  %520 = vmatmul.mubr.f32.gmra.mxu0 %v194
  %v521 = vpop.f32.mrf.mxu0
  %v522 = vadd.f32 %v85, %v521
  %v523 = vpop.f32.mrf.mxu0
  %524 = vmatprep.mubr.f32.mxu0 0.0
  %525 = vmatmul.mubr.f32.gmra.mxu0 %v197
  %v526 = vpop.f32.mrf.mxu0
  %v527 = vadd.f32 %v85, %v526
  %v528 = vpop.f32.mrf.mxu0
  %529 = vmatprep.mubr.f32.mxu0 0.0
  %530 = vmatmul.mubr.f32.gmra.mxu0 %v200
  %v531 = vpop.f32.mrf.mxu0
  %v532 = vadd.f32 %v85, %v531
  %v533 = vpop.f32.mrf.mxu0
  %534 = vmatprep.mubr.f32.mxu0 0.0
  %535 = vmatmul.mubr.f32.gmra.mxu0 %v203
  %v536 = vpop.f32.mrf.mxu0
  %v537 = vadd.f32 %v85, %v536
  %v538 = vpop.f32.mrf.mxu0
  %539 = vmatprep.mubr.f32.mxu0 0.0
  %540 = vmatmul.mubr.f32.gmra.mxu0 %v206
  %v541 = vpop.f32.mrf.mxu0
  %v542 = vadd.f32 %v85, %v541
  %v543 = vpop.f32.mrf.mxu0
  %544 = vmatprep.mubr.f32.mxu0 0.0
  %545 = vmatmul.mubr.f32.gmra.mxu0 %v209
  %v546 = vpop.f32.mrf.mxu0
  %v547 = vadd.f32 %v85, %v546
  %v548 = vpop.f32.mrf.mxu0
  %549 = vmatprep.mubr.f32.mxu0 0.0
  %550 = vmatmul.mubr.f32.gmra.mxu0 %v212
  %v551 = vpop.f32.mrf.mxu0
  %v552 = vadd.f32 %v85, %v551
  %v553 = vpop.f32.mrf.mxu0
  %554 = vmatprep.mubr.f32.mxu0 0.0
  %555 = vmatmul.mubr.f32.gmra.mxu0 %v215
  %v556 = vpop.f32.mrf.mxu0
  %v557 = vadd.f32 %v85, %v556
  %v558 = vpop.f32.mrf.mxu0
  %559 = vmatprep.mubr.f32.mxu0 0.0
  %560 = vmatmul.mubr.f32.gmra.mxu0 %v218
  %v561 = vpop.f32.mrf.mxu0
  %v562 = vadd.f32 %v85, %v561
  %v563 = vpop.f32.mrf.mxu0
  %564 = vmatprep.mubr.f32.mxu0 0.0
  %565 = vmatmul.mubr.f32.gmra.mxu0 %v221
  %v566 = vpop.f32.mrf.mxu0
  %v567 = vadd.f32 %v85, %v566
  %v568 = vpop.f32.mrf.mxu0
  %569 = vmatprep.mubr.f32.mxu0 0.0
  %570 = vmatmul.mubr.f32.gmra.mxu0 %v224
  %v571 = vpop.f32.mrf.mxu0
  %v572 = vadd.f32 %v85, %v571
  %v573 = vpop.f32.mrf.mxu0
  %574 = vmatprep.mubr.f32.mxu0 0.0
  %575 = vmatmul.mubr.f32.gmra.mxu0 %v227
  %v576 = vpop.f32.mrf.mxu0
  %v577 = vadd.f32 %v85, %v576
  %v578 = vpop.f32.mrf.mxu0
  %579 = vmatprep.mubr.f32.mxu0 0.0
  %580 = vmatmul.mubr.f32.gmra.mxu0 %v230
  %v581 = vpop.f32.mrf.mxu0
  %v582 = vadd.f32 %v85, %v581
  %v583 = vpop.f32.mrf.mxu0
  %584 = vmatprep.mubr.f32.mxu0 0.0
  %585 = vmatmul.mubr.f32.gmra.mxu0 %v233
  %v586 = vpop.f32.mrf.mxu0
  %v587 = vadd.f32 %v85, %v586
  %v588 = vpop.f32.mrf.mxu0
  %589 = vmatprep.mubr.f32.mxu0 0.0
  %590 = vmatmul.mubr.f32.gmra.mxu0 %v236
  %v591 = vpop.f32.mrf.mxu0
  %v592 = vadd.f32 %v85, %v591
  %v593 = vpop.f32.mrf.mxu0
  %594 = vmatprep.mubr.f32.mxu0 0.0
  %595 = vmatmul.mubr.f32.gmra.mxu0 %v239
  %v596 = vpop.f32.mrf.mxu0
  %v597 = vadd.f32 %v85, %v596
  %v598 = vpop.f32.mrf.mxu0
  %599 = vmatprep.mubr.f32.mxu0 0.0
  %600 = vmatmul.mubr.f32.gmra.mxu0 %v242
  %v601 = vpop.f32.mrf.mxu0
  %v602 = vadd.f32 %v85, %v601
  %v603 = vpop.f32.mrf.mxu0
  %604 = vmatprep.mubr.f32.mxu0 0.0
  %605 = vmatmul.mubr.f32.gmra.mxu0 %v245
  %v606 = vpop.f32.mrf.mxu0
  %v607 = vadd.f32 %v85, %v606
  %v608 = vpop.f32.mrf.mxu0
  %609 = vmatprep.mubr.f32.mxu0 0.0
  %610 = vmatmul.mubr.f32.gmra.mxu0 %v248
  %v611 = vpop.f32.mrf.mxu0
  %v612 = vadd.f32 %v85, %v611
  %v613 = vpop.f32.mrf.mxu0
  %614 = vmatprep.mubr.f32.mxu0 0.0
  %615 = vmatmul.mubr.f32.gmra.mxu0 %v251
  %v616 = vpop.f32.mrf.mxu0
  %v617 = vadd.f32 %v85, %v616
  %v618 = vpop.f32.mrf.mxu0
  %619 = vmatprep.mubr.f32.mxu0 0.0
  %620 = vmatmul.mubr.f32.gmra.mxu0 %v254
  %v621 = vpop.f32.mrf.mxu0
  %v622 = vadd.f32 %v85, %v621
  %v623 = vpop.f32.mrf.mxu0
  %624 = vmatprep.mubr.f32.mxu0 0.0
  %625 = vmatmul.mubr.f32.gmra.mxu0 %v257
  %v626 = vpop.f32.mrf.mxu0
  %v627 = vadd.f32 %v85, %v626
  %v628 = vpop.f32.mrf.mxu0
  %629 = vmatprep.mubr.f32.mxu0 0.0
  %630 = vmatmul.mubr.f32.gmra.mxu0 %v260
  %v631 = vpop.f32.mrf.mxu0
  %v632 = vadd.f32 %v85, %v631
  %v633 = vpop.f32.mrf.mxu0
  %634 = vmatprep.mubr.f32.mxu0 0.0
  %635 = vmatmul.mubr.f32.gmra.mxu0 %v263
  %v636 = vpop.f32.mrf.mxu0
  %v637 = vadd.f32 %v85, %v636
  %v638 = vpop.f32.mrf.mxu0
  %639 = vmatprep.mubr.f32.mxu0 0.0
  %640 = vmatmul.mubr.f32.gmra.mxu0 %v266
  %v641 = vpop.f32.mrf.mxu0
  %v642 = vadd.f32 %v85, %v641
  %v643 = vpop.f32.mrf.mxu0
  %644 = vmatprep.mubr.f32.mxu0 0.0
  %645 = vmatmul.mubr.f32.gmra.mxu0 %v269
  %v646 = vpop.f32.mrf.mxu0
  %v647 = vadd.f32 %v85, %v646
  %v648 = vpop.f32.mrf.mxu0
  %649 = vmatprep.mubr.f32.mxu0 0.0
  %650 = vmatmul.mubr.f32.gmra.mxu0 %v272
  %v651 = vpop.f32.mrf.mxu0
  %v652 = vadd.f32 %v85, %v651
  %v653 = vpop.f32.mrf.mxu0
  %654 = vmatprep.mubr.f32.mxu0 0.0
  %655 = vmatmul.mubr.f32.gmra.mxu0 %v275
  %v656 = vpop.f32.mrf.mxu0
  %v657 = vadd.f32 %v85, %v656
  %v658 = vpop.f32.mrf.mxu0
  %659 = vmatprep.mubr.f32.mxu0 0.0
  %660 = vmatmul.mubr.f32.gmra.mxu0 %v278
  %v661 = vpop.f32.mrf.mxu0
  %v662 = vadd.f32 %v85, %v661
  %v663 = vpop.f32.mrf.mxu0
  %664 = vdwg.mxu0
  %vm665 = vcmask 523264
  %666 = vst.msk [vmem:[%s3] sm:$0xff] %vm665, %v347
  %667 = vst.msk [vmem:[%s3 + $0x8] sm:$0xff] %vm665, %v352
  %668 = vst.msk [vmem:[%s3 + $0x10] sm:$0xff] %vm665, %v357
  %669 = vst.msk [vmem:[%s3 + $0x18] sm:$0xff] %vm665, %v362
  %670 = vst.msk [vmem:[%s3 + $0x20] sm:$0xff] %vm665, %v367
  %671 = vst.msk [vmem:[%s3 + $0x28] sm:$0xff] %vm665, %v372
  %672 = vst.msk [vmem:[%s3 + $0x30] sm:$0xff] %vm665, %v377
  %673 = vst.msk [vmem:[%s3 + $0x38] sm:$0xff] %vm665, %v382
  %674 = vst.msk [vmem:[%s3 + $0x40] sm:$0xff] %vm665, %v387
  %675 = vst.msk [vmem:[%s3 + $0x48] sm:$0xff] %vm665, %v392
  %676 = vst.msk [vmem:[%s3 + $0x50] sm:$0xff] %vm665, %v397
  %677 = vst.msk [vmem:[%s3 + $0x58] sm:$0xff] %vm665, %v402
  %678 = vst.msk [vmem:[%s3 + $0x60] sm:$0xff] %vm665, %v407
  %679 = vst.msk [vmem:[%s3 + $0x68] sm:$0xff] %vm665, %v412
  %680 = vst.msk [vmem:[%s3 + $0x70] sm:$0xff] %vm665, %v417
  %681 = vst.msk [vmem:[%s3 + $0x78] sm:$0xff] %vm665, %v422
  %682 = vst.msk [vmem:[%s3 + $0x80] sm:$0xff] %vm665, %v427
  %683 = vst.msk [vmem:[%s3 + $0x88] sm:$0xff] %vm665, %v432
  %684 = vst.msk [vmem:[%s3 + $0x90] sm:$0xff] %vm665, %v437
  %685 = vst.msk [vmem:[%s3 + $0x98] sm:$0xff] %vm665, %v442
  %686 = vst.msk [vmem:[%s3 + $0xa0] sm:$0xff] %vm665, %v447
  %687 = vst.msk [vmem:[%s3 + $0xa8] sm:$0xff] %vm665, %v452
  %688 = vst.msk [vmem:[%s3 + $0xb0] sm:$0xff] %vm665, %v457
  %689 = vst.msk [vmem:[%s3 + $0xb8] sm:$0xff] %vm665, %v462
  %690 = vst.msk [vmem:[%s3 + $0xc0] sm:$0xff] %vm665, %v467
  %691 = vst.msk [vmem:[%s3 + $0xc8] sm:$0xff] %vm665, %v472
  %692 = vst.msk [vmem:[%s3 + $0xd0] sm:$0xff] %vm665, %v477
  %693 = vst.msk [vmem:[%s3 + $0xd8] sm:$0xff] %vm665, %v482
  %694 = vst.msk [vmem:[%s3 + $0xe0] sm:$0xff] %vm665, %v487
  %695 = vst.msk [vmem:[%s3 + $0xe8] sm:$0xff] %vm665, %v492
  %696 = vst.msk [vmem:[%s3 + $0xf0] sm:$0xff] %vm665, %v497
  %697 = vst.msk [vmem:[%s3 + $0xf8] sm:$0xff] %vm665, %v502
  %698 = vst.msk [vmem:[%s3 + $0x100] sm:$0xff] %vm665, %v507
  %699 = vst.msk [vmem:[%s3 + $0x108] sm:$0xff] %vm665, %v512
  %700 = vst.msk [vmem:[%s3 + $0x110] sm:$0xff] %vm665, %v517
  %701 = vst.msk [vmem:[%s3 + $0x118] sm:$0xff] %vm665, %v522
  %702 = vst.msk [vmem:[%s3 + $0x120] sm:$0xff] %vm665, %v527
  %703 = vst.msk [vmem:[%s3 + $0x128] sm:$0xff] %vm665, %v532
  %704 = vst.msk [vmem:[%s3 + $0x130] sm:$0xff] %vm665, %v537
  %705 = vst.msk [vmem:[%s3 + $0x138] sm:$0xff] %vm665, %v542
  %706 = vst.msk [vmem:[%s3 + $0x140] sm:$0xff] %vm665, %v547
  %707 = vst.msk [vmem:[%s3 + $0x148] sm:$0xff] %vm665, %v552
  %708 = vst.msk [vmem:[%s3 + $0x150] sm:$0xff] %vm665, %v557
  %709 = vst.msk [vmem:[%s3 + $0x158] sm:$0xff] %vm665, %v562
  %710 = vst.msk [vmem:[%s3 + $0x160] sm:$0xff] %vm665, %v567
  %711 = vst.msk [vmem:[%s3 + $0x168] sm:$0xff] %vm665, %v572
  %712 = vst.msk [vmem:[%s3 + $0x170] sm:$0xff] %vm665, %v577
  %713 = vst.msk [vmem:[%s3 + $0x178] sm:$0xff] %vm665, %v582
  %714 = vst.msk [vmem:[%s3 + $0x180] sm:$0xff] %vm665, %v587
  %715 = vst.msk [vmem:[%s3 + $0x188] sm:$0xff] %vm665, %v592
  %716 = vst.msk [vmem:[%s3 + $0x190] sm:$0xff] %vm665, %v597
  %717 = vst.msk [vmem:[%s3 + $0x198] sm:$0xff] %vm665, %v602
  %718 = vst.msk [vmem:[%s3 + $0x1a0] sm:$0xff] %vm665, %v607
  %719 = vst.msk [vmem:[%s3 + $0x1a8] sm:$0xff] %vm665, %v612
  %720 = vst.msk [vmem:[%s3 + $0x1b0] sm:$0xff] %vm665, %v617
  %721 = vst.msk [vmem:[%s3 + $0x1b8] sm:$0xff] %vm665, %v622
  %722 = vst.msk [vmem:[%s3 + $0x1c0] sm:$0xff] %vm665, %v627
  %723 = vst.msk [vmem:[%s3 + $0x1c8] sm:$0xff] %vm665, %v632
  %724 = vst.msk [vmem:[%s3 + $0x1d0] sm:$0xff] %vm665, %v637
  %725 = vst.msk [vmem:[%s3 + $0x1d8] sm:$0xff] %vm665, %v642
  %726 = vst.msk [vmem:[%s3 + $0x1e0] sm:$0xff] %vm665, %v647
  %727 = vst.msk [vmem:[%s3 + $0x1e8] sm:$0xff] %vm665, %v652
  %728 = vst.msk [vmem:[%s3 + $0x1f0] sm:$0xff] %vm665, %v657
  %729 = vst.msk [vmem:[%s3 + $0x1f8] sm:$0xff] %vm665, %v662
  // Predicated region
  $region14: #{tpu_custom_call.1} parent=0 // pred_check
    _
  $region15: #{tpu_custom_call.1} parent=0 // pred_check_branch
    %731 = sbr.rel (0) target = $region17
  $region16: #{tpu_custom_call.1} parent=0 // pred_region
    _
  $region17: #{tpu_custom_call.1} parent=0 // pred_fallthru
    _
  // Predicated region
  $region18: #{tpu_custom_call.1} parent=0 // pred_check
    _
  $region19: #{tpu_custom_call.1} parent=0 // pred_check_branch
    %733 = sbr.rel (0) target = $region21
  $region20: #{tpu_custom_call.1} parent=0 // pred_region
    _
  $region21: #{tpu_custom_call.1} parent=0 // pred_fallthru
    _

</llo_original>
